<compile_context>
chip_gen: v7x
topology: tpu7x:2x2x1
jax: 0.10.0
libtpu: 0.0.40
codegen_flags: <defaults>
</compile_context>

<pallas_src>
import jax
import jax.numpy as jnp
from jax import lax
from jax.experimental import pallas as pl
from jax.experimental.pallas import tpu as pltpu

HIDDEN_SIZE = 32
INPUT_SIZE = 64     # vocab size
LANE = 128          # fused gate dim 3H = 96 is padded to 128 lanes


def gru_encoder_kernel(tok_ref,               # (T, 1)   int32 token ids
                       emb_ref,               # (V, H)   embedding table (VMEM resident)
                       w_ih_ref, w_hh_ref,    # (H, 128) fused, transposed, lane-padded gate weights
                       b_ih_ref, b_hh_ref,    # (1, 128) fused, lane-padded biases
                       h0_ref,                # (1, H)   initial hidden state
                       out_ref):              # (T, H)   all hidden states
    T, H = out_ref.shape
    V = emb_ref.shape[0]

    # --- 1) Embedding lookup for all steps: one-hot @ table (single MXU matmul, no gather) ---
    tok = tok_ref[...]                                            # (T, 1) int32
    col = lax.broadcasted_iota(jnp.int32, (T, V), 1)              # (T, V)
    onehot = (col == tok).astype(jnp.float32)                     # (T, V)
    x_all = jnp.dot(onehot, emb_ref[...],
                    preferred_element_type=jnp.float32)           # (T, H)

    # --- 2) Input-side gate pre-activations for all steps (off the serial path) ---
    gi_all = jnp.dot(x_all, w_ih_ref[...],
                     preferred_element_type=jnp.float32) + b_ih_ref[...]   # (T, 128)

    # --- 3) Serial GRU recurrence: one hidden-side matmul + gate math per step ---
    w_hh = w_hh_ref[...]                                          # hoisted VMEM loads
    b_hh = b_hh_ref[...]
    h = h0_ref[...]                                               # (1, H)
    for t in range(T):                                            # static unroll (T is trace-time constant)
        gi = gi_all[t:t + 1, :]                                   # (1, 128) static slice
        gh = jnp.dot(h, w_hh, preferred_element_type=jnp.float32) + b_hh   # (1, 128)
        # PyTorch nn.GRU gate order: r, z, n  (lanes [0:H], [H:2H], [2H:3H]).
        r = jax.nn.sigmoid(gi[:, 0:H] + gh[:, 0:H])
        z = jax.nn.sigmoid(gi[:, H:2 * H] + gh[:, H:2 * H])
        n = jnp.tanh(gi[:, 2 * H:3 * H] + r * gh[:, 2 * H:3 * H])
        h = (1.0 - z) * n + z * h
        out_ref[pl.ds(t, 1), :] = h                               # static row store


def gru_sequence(fused, tokens, h0):
    """Run the fused embedding+GRU encoder over a token sequence.

    tokens: (T,) int32,  h0: (1, H) float32  ->  (T, 1, H) float32 (all hidden states).
    """
    T = int(tokens.shape[0])
    H = h0.shape[-1]
    vmem = pltpu.MemorySpace.VMEM

    out = pl.pallas_call(
        gru_encoder_kernel,
        out_shape=jax.ShapeDtypeStruct((T, H), jnp.float32),
        in_specs=[pl.BlockSpec(memory_space=vmem)] * 7,     # whole arrays, VMEM resident
        out_specs=pl.BlockSpec(memory_space=vmem),
    )(tokens.reshape(T, 1).astype(jnp.int32),
      fused["emb"], fused["w_ih_t"], fused["w_hh_t"],
      fused["b_ih"], fused["b_hh"],
      h0.astype(jnp.float32).reshape(1, H))
    return out.reshape(T, 1, H)


def init_params(key, input_size, hidden_size):
    """Raw parameters matching the PyTorch module's layout."""
    keys = jax.random.split(key, 5)
    H = hidden_size
    embedding = jax.random.normal(keys[0], (input_size, H), dtype=jnp.float32)   # nn.Embedding: N(0,1)
    k = 1.0 / jnp.sqrt(jnp.float32(H))                                           # nn.GRU: U(-1/sqrt(H), 1/sqrt(H))
    w_ih = jax.random.uniform(keys[1], (3 * H, H), jnp.float32, -k, k)           # rows: r, z, n
    w_hh = jax.random.uniform(keys[2], (3 * H, H), jnp.float32, -k, k)
    b_ih = jax.random.uniform(keys[3], (3 * H,), jnp.float32, -k, k)
    b_hh = jax.random.uniform(keys[4], (3 * H,), jnp.float32, -k, k)
    return {"embedding": embedding, "w_ih": w_ih, "w_hh": w_hh,
            "b_ih": b_ih, "b_hh": b_hh}


def make_fused_params(raw):
    """One-time prep: transpose + fuse + lane-pad the gate weights/biases."""
    V, H = raw["embedding"].shape
    np_ = ((3 * H + LANE - 1) // LANE) * LANE
    pad = np_ - 3 * H
    return {
        "emb": raw["embedding"],                                 # (V, H)
        "w_ih_t": jnp.pad(raw["w_ih"].T, ((0, 0), (0, pad))),    # (H, 3H) -> (H, 128)
        "w_hh_t": jnp.pad(raw["w_hh"].T, ((0, 0), (0, pad))),
        "b_ih": jnp.pad(raw["b_ih"], (0, pad)).reshape(1, np_),
        "b_hh": jnp.pad(raw["b_hh"], (0, pad)).reshape(1, np_),
    }


def encoder_rnn_forward(fused, token, hidden):
    """Mirrors EncoderRNN.forward: token id + (1,1,H) hidden -> (output, hidden), both (1,1,H)."""
    H = hidden.shape[-1]
    tokens = jnp.atleast_1d(token).astype(jnp.int32)          # seq_len = 1
    out = gru_sequence(fused, tokens, hidden.reshape(1, H))   # (1, 1, H)
    out = out.reshape(1, 1, H)
    return out, out


def reference_sequence(raw, tokens, h0):
    """Pure-JAX reference of PyTorch nn.GRU semantics over a sequence."""
    H = raw["embedding"].shape[1]

    def step(h, tok):
        x = raw["embedding"][tok].reshape(1, H)
        gi = x @ raw["w_ih"].T + raw["b_ih"]
        gh = h @ raw["w_hh"].T + raw["b_hh"]
        i_r, i_z, i_n = gi[:, :H], gi[:, H:2 * H], gi[:, 2 * H:]
        h_r, h_z, h_n = gh[:, :H], gh[:, H:2 * H], gh[:, 2 * H:]
        r = jax.nn.sigmoid(i_r + h_r)
        z = jax.nn.sigmoid(i_z + h_z)
        n = jnp.tanh(i_n + r * h_n)
        h_new = (1.0 - z) * n + z * h
        return h_new, h_new

    h_final, outs = jax.lax.scan(step, h0, tokens)
    return outs.reshape(-1, 1, H), h_final


if __name__ == "__main__":
    key = jax.random.PRNGKey(0)
    raw = init_params(key, INPUT_SIZE, HIDDEN_SIZE)
    fused = make_fused_params(raw)

    # --- single-step forward (exactly the PyTorch module's forward) ---
    token = jnp.array(7, dtype=jnp.int32)
    hidden0 = jnp.zeros((1, 1, HIDDEN_SIZE), dtype=jnp.float32)   # init_hidden()
    output, hidden1 = encoder_rnn_forward(fused, token, hidden0)
    output = jax.block_until_ready(output)
    hidden1 = jax.block_until_ready(hidden1)

    ref_outs, ref_h = reference_sequence(raw, token.reshape(1), hidden0.reshape(1, HIDDEN_SIZE))
    assert output.shape == (1, 1, HIDDEN_SIZE)
    assert hidden1.shape == (1, 1, HIDDEN_SIZE)
    assert jnp.allclose(output, ref_outs[0].reshape(1, 1, HIDDEN_SIZE), atol=1e-4, rtol=1e-4)
    assert jnp.allclose(hidden1, ref_h.reshape(1, 1, HIDDEN_SIZE), atol=1e-4, rtol=1e-4)

    # --- fused multi-step encoder (amortizes launch + weight DMA over the sequence) ---
    SEQ_LEN = 8
    tokens = jax.random.randint(jax.random.PRNGKey(1), (SEQ_LEN,), 0, INPUT_SIZE, dtype=jnp.int32)
    seq_out = gru_sequence(fused, tokens, jnp.zeros((1, HIDDEN_SIZE), jnp.float32))
    seq_out = jax.block_until_ready(seq_out)

    ref_seq_out, ref_seq_h = reference_sequence(raw, tokens, jnp.zeros((1, HIDDEN_SIZE), jnp.float32))
    assert seq_out.shape == (SEQ_LEN, 1, HIDDEN_SIZE)
    assert jnp.allclose(seq_out, ref_seq_out, atol=1e-4, rtol=1e-4)
    assert jnp.allclose(seq_out[-1], ref_seq_h, atol=1e-4, rtol=1e-4)

    print("KERNEL_OK")
</pallas_src>

<mosaic_0001>
module attributes {stable_mosaic.version = 11 : i64} {
  func.func @gru_encoder_kernel(%arg0: memref<1x1xi32, #tpu.memory_space<vmem>>, %arg1: memref<64x32xf32, #tpu.memory_space<vmem>>, %arg2: memref<32x128xf32, #tpu.memory_space<vmem>>, %arg3: memref<32x128xf32, #tpu.memory_space<vmem>>, %arg4: memref<1x128xf32, #tpu.memory_space<vmem>>, %arg5: memref<1x128xf32, #tpu.memory_space<vmem>>, %arg6: memref<1x32xf32, #tpu.memory_space<vmem>>, %arg7: memref<1x32xf32, #tpu.memory_space<vmem>>) attributes {dimension_semantics = [], scalar_prefetch = 0 : i64, scratch_operands = 0 : i64, tpu.core_type = #tpu.core_type<tc>} {
    %c0 = arith.constant 0 : index
    %c0_0 = arith.constant 0 : index
    %0 = vector.load %arg0[%c0, %c0_0] : memref<1x1xi32, #tpu.memory_space<vmem>>, vector<1x1xi32>
    %1 = tpu.iota {dimensions = array<i32: 1>} : vector<1x64xi32>
    %2 = vector.broadcast %0 : vector<1x1xi32> to vector<1x64xi32>
    %3 = arith.cmpi eq, %1, %2 : vector<1x64xi32>
    %4 = arith.extui %3 : vector<1x64xi1> to vector<1x64xi32>
    %5 = arith.sitofp %4 : vector<1x64xi32> to vector<1x64xf32>
    %c0_1 = arith.constant 0 : index
    %c0_2 = arith.constant 0 : index
    %6 = vector.load %arg1[%c0_1, %c0_2] : memref<64x32xf32, #tpu.memory_space<vmem>>, vector<64x32xf32>
    %cst = arith.constant dense<0.000000e+00> : vector<1x32xf32>
    %7 = tpu.matmul %5, %6, %cst {dimension_numbers = #tpu.dot_dimension_numbers<[1], [0], [0], [1], [0, 0, 1, 1], [], []>} : vector<1x64xf32>, vector<64x32xf32>, vector<1x32xf32> -> vector<1x32xf32>
    %c0_3 = arith.constant 0 : index
    %c0_4 = arith.constant 0 : index
    %8 = vector.load %arg2[%c0_3, %c0_4] : memref<32x128xf32, #tpu.memory_space<vmem>>, vector<32x128xf32>
    %cst_5 = arith.constant dense<0.000000e+00> : vector<1x128xf32>
    %9 = tpu.matmul %7, %8, %cst_5 {dimension_numbers = #tpu.dot_dimension_numbers<[1], [0], [0], [1], [0, 0, 1, 1], [], []>} : vector<1x32xf32>, vector<32x128xf32>, vector<1x128xf32> -> vector<1x128xf32>
    %c0_6 = arith.constant 0 : index
    %c0_7 = arith.constant 0 : index
    %10 = vector.load %arg4[%c0_6, %c0_7] : memref<1x128xf32, #tpu.memory_space<vmem>>, vector<1x128xf32>
    %11 = arith.addf %9, %10 : vector<1x128xf32>
    %c0_8 = arith.constant 0 : index
    %c0_9 = arith.constant 0 : index
    %12 = vector.load %arg3[%c0_8, %c0_9] : memref<32x128xf32, #tpu.memory_space<vmem>>, vector<32x128xf32>
    %c0_10 = arith.constant 0 : index
    %c0_11 = arith.constant 0 : index
    %13 = vector.load %arg5[%c0_10, %c0_11] : memref<1x128xf32, #tpu.memory_space<vmem>>, vector<1x128xf32>
    %c0_12 = arith.constant 0 : index
    %c0_13 = arith.constant 0 : index
    %14 = vector.load %arg6[%c0_12, %c0_13] : memref<1x32xf32, #tpu.memory_space<vmem>>, vector<1x32xf32>
    %cst_14 = arith.constant dense<0.000000e+00> : vector<1x128xf32>
    %15 = tpu.matmul %14, %12, %cst_14 {dimension_numbers = #tpu.dot_dimension_numbers<[1], [0], [0], [1], [0, 0, 1, 1], [], []>} : vector<1x32xf32>, vector<32x128xf32>, vector<1x128xf32> -> vector<1x128xf32>
    %16 = arith.addf %15, %13 : vector<1x128xf32>
    %17 = vector.extract_strided_slice %11 {offsets = [0, 0], sizes = [1, 32], strides = [1, 1]} : vector<1x128xf32> to vector<1x32xf32>
    %18 = vector.extract_strided_slice %16 {offsets = [0, 0], sizes = [1, 32], strides = [1, 1]} : vector<1x128xf32> to vector<1x32xf32>
    %19 = arith.addf %17, %18 : vector<1x32xf32>
    %20 = arith.negf %19 : vector<1x32xf32>
    %21 = math.exp %20 : vector<1x32xf32>
    %cst_15 = arith.constant 1.000000e+00 : f32
    %22 = vector.broadcast %cst_15 : f32 to vector<1x32xf32>
    %23 = arith.addf %22, %21 : vector<1x32xf32>
    %24 = arith.divf %22, %23 : vector<1x32xf32>
    %25 = vector.extract_strided_slice %11 {offsets = [0, 32], sizes = [1, 32], strides = [1, 1]} : vector<1x128xf32> to vector<1x32xf32>
    %26 = vector.extract_strided_slice %16 {offsets = [0, 32], sizes = [1, 32], strides = [1, 1]} : vector<1x128xf32> to vector<1x32xf32>
    %27 = arith.addf %25, %26 : vector<1x32xf32>
    %28 = arith.negf %27 : vector<1x32xf32>
    %29 = math.exp %28 : vector<1x32xf32>
    %cst_16 = arith.constant 1.000000e+00 : f32
    %30 = vector.broadcast %cst_16 : f32 to vector<1x32xf32>
    %31 = arith.addf %30, %29 : vector<1x32xf32>
    %32 = arith.divf %30, %31 : vector<1x32xf32>
    %33 = vector.extract_strided_slice %11 {offsets = [0, 64], sizes = [1, 32], strides = [1, 1]} : vector<1x128xf32> to vector<1x32xf32>
    %34 = vector.extract_strided_slice %16 {offsets = [0, 64], sizes = [1, 32], strides = [1, 1]} : vector<1x128xf32> to vector<1x32xf32>
    %35 = arith.mulf %24, %34 : vector<1x32xf32>
    %36 = arith.addf %33, %35 : vector<1x32xf32>
    %37 = math.tanh %36 : vector<1x32xf32>
    %cst_17 = arith.constant 1.000000e+00 : f32
    %38 = vector.broadcast %cst_17 : f32 to vector<1x32xf32>
    %39 = arith.subf %38, %32 : vector<1x32xf32>
    %40 = arith.mulf %39, %37 : vector<1x32xf32>
    %41 = arith.mulf %32, %14 : vector<1x32xf32>
    %42 = arith.addf %40, %41 : vector<1x32xf32>
    %c0_18 = arith.constant 0 : index
    %c0_19 = arith.constant 0 : index
    %43 = vector.load %arg7[%c0_18, %c0_19] : memref<1x32xf32, #tpu.memory_space<vmem>>, vector<1x32xf32>
    tpu.vector_store %arg7[%c0_18, %c0_19], %42 {strides = array<i32>} : memref<1x32xf32, #tpu.memory_space<vmem>>, vector<1x32xf32>,
    return
  }
}

</mosaic_0001>

<llo_original>
// kernel: tpu_custom_call.1
$region0: #{tpu_custom_call.1}
  #allocation0 [shape = 'u32[]', space=smem, size = 0x4, offset = 0x4, fixed_abs, tag = 'smem constant byte address 0x4 - core index']
  #allocation1 [shape = 'u32[144,128]{1,0:T(1,128)}', space=vmem, size = 0x12000, scoped, tag = 'internal scratch']
  #allocation2 [shape = 's32[1,1]{1,0:T(1,128)S(1)}', space=vmem, size = 0x200, scoped, tag = 'scoped memory for tpu_custom_call.1']
  %s0 = inlined_call_operand.<no memory space> [shape: s32[1,1], index: 0, kind: input, shape index: {}]
  %s1 = inlined_call_operand.vmem [shape: f32[64,32], index: 1, kind: input, shape index: {}]
  %s2 = inlined_call_operand.vmem [shape: f32[32,128], index: 2, kind: input, shape index: {}]
  %s3 = inlined_call_operand.vmem [shape: f32[32,128], index: 3, kind: input, shape index: {}]
  %s4 = inlined_call_operand.vmem [shape: f32[1,128], index: 4, kind: input, shape index: {}]
  %s5 = inlined_call_operand.vmem [shape: f32[1,128], index: 5, kind: input, shape index: {}]
  %s6 = inlined_call_operand.vmem [shape: f32[1,32], index: 6, kind: input, shape index: {}]
  %s7 = inlined_call_operand.hbm [shape: f32[1,32], index: 7, kind: output, shape index: {}]
  %s8 = sld [smem:[#allocation0]]
  $region38: #{tpu_custom_call.1} parent=0
    _
  %s10 = ssub.s32 1, %s8
  %s11 = scalar_select 0, %s10, %s8
  %v12 = vstv %s0
  %13 = vst [vmem:[#allocation2] sm:$0x1] %v12
  $region1: #{tpu_custom_call.1} parent=0
    #allocation3 [shape = 'u8[512]{0}', space=vmem, size = 0x400, scoped, tag = 'output window, operand 0, single buffered']
    #allocation4 [shape = 's32[1]{0}', space=sflag, size = 0x4, scoped, tag = 'scoped memory for tpu_custom_call.1']
    %14 = vsyncpa [#allocation4], 0
    // Predicated region
    $region2: #{tpu_custom_call.1} parent=1 // pred_check
      _
    $region3: #{tpu_custom_call.1} parent=1 // pred_check_branch
      %16 = sbr.rel (0) target = $region5
    $region4: #{tpu_custom_call.1} parent=1 // pred_region
      _
    $region5: #{tpu_custom_call.1} parent=1 // pred_fallthru
      _
    // Predicated region
    $region6: #{tpu_custom_call.1} parent=1 // pred_check
      _
    $region7: #{tpu_custom_call.1} parent=1 // pred_check_branch
      %18 = sbr.rel (0) target = $region9
    $region8: #{tpu_custom_call.1} parent=1 // pred_region
      _
    $region9: #{tpu_custom_call.1} parent=1 // pred_fallthru
      _
    // Predicated region
    $region10: #{tpu_custom_call.1} parent=1 // pred_check
      _
    $region11: #{tpu_custom_call.1} parent=1 // pred_check_branch
      %20 = sbr.rel (0) target = $region13
    $region12: #{tpu_custom_call.1} parent=1 // pred_region
      _
    $region13: #{tpu_custom_call.1} parent=1 // pred_fallthru
      _
    // Predicated region
    $region14: #{tpu_custom_call.1} parent=1 // pred_check
      _
    $region15: #{tpu_custom_call.1} parent=1 // pred_check_branch
      %22 = sbr.rel (0) target = $region17
    $region16: #{tpu_custom_call.1} parent=1 // pred_region
      _
    $region17: #{tpu_custom_call.1} parent=1 // pred_fallthru
      _
    // Predicated region
    $region18: #{tpu_custom_call.1} parent=1 // pred_check
      _
    $region19: #{tpu_custom_call.1} parent=1 // pred_check_branch
      %24 = sbr.rel (0) target = $region21
    $region20: #{tpu_custom_call.1} parent=1 // pred_region
      _
    $region21: #{tpu_custom_call.1} parent=1 // pred_fallthru
      _
    // Predicated region
    $region22: #{tpu_custom_call.1} parent=1 // pred_check
      _
    $region23: #{tpu_custom_call.1} parent=1 // pred_check_branch
      %26 = sbr.rel (0) target = $region25
    $region24: #{tpu_custom_call.1} parent=1 // pred_region
      _
    $region25: #{tpu_custom_call.1} parent=1 // pred_fallthru
      _
    // Predicated region
    $region26: #{tpu_custom_call.1} parent=1 // pred_check
      _
    $region27: #{tpu_custom_call.1} parent=1 // pred_check_branch
      %28 = sbr.rel (0) target = $region29
    $region28: #{tpu_custom_call.1} parent=1 // pred_region
      _
    $region29: #{tpu_custom_call.1} parent=1 // pred_fallthru
      _
    %v29 = vld [vmem:[#allocation2] sm:$0x1]
    %v30 = vlaneseq
    %v31 = vand.u32 %v30, 127
    %32 = vset.pattern.permute.xlu0 0
    %33 = vperm.xlu0 %32, %v29
    %v34 = vpop.permute.xlu0 %33
    %v35 = vlaneseq
    %v36 = vshrl.u32 %v35, 7
    %v37 = vsub.s32 0, %v36
    %v38 = vrot.slane %v34, %v37
    %vm39 = vcmp.eq.s32.totalorder %v31, %v38
    %v40 = vsel %vm39, 1, 0
    %v41 = vcvt.s32.f32 %v40
    %v42 = vld [vmem:[%s1] sm:$0xff]
    %v43 = vld [vmem:[%s1 + $0x8] sm:$0xff]
    %v44 = vld [vmem:[%s1 + $0x10] sm:$0xff]
    %v45 = vld [vmem:[%s1 + $0x18] sm:$0xff]
    %v46 = vld [vmem:[%s1 + $0x20] sm:$0xff]
    %v47 = vld [vmem:[%s1 + $0x28] sm:$0xff]
    %v48 = vld [vmem:[%s1 + $0x30] sm:$0xff]
    %v49 = vld [vmem:[%s1 + $0x38] sm:$0xff]
    %vm50 = vcmask 523264
    %v52 = vsel %vm50, %v41, 0
    %54 = vmatprep.subr.mxu0 0.0
    %55 = vmatpush1.msra.mxu0 %v42
    %56 = vmatprep.subr.mxu0 0.0
    %57 = vmatpush1.msra.mxu0 %v43
    %58 = vmatprep.subr.mxu0 0.0
    %59 = vmatpush1.msra.mxu0 %v44
    %60 = vmatprep.subr.mxu0 0.0
    %61 = vmatpush1.msra.mxu0 %v45
    %62 = vmatprep.subr.mxu0 0.0
    %63 = vmatpush1.msra.mxu0 %v46
    %64 = vmatprep.subr.mxu0 0.0
    %65 = vmatpush1.msra.mxu0 %v47
    %66 = vmatprep.subr.mxu0 0.0
    %67 = vmatpush1.msra.mxu0 %v48
    %68 = vmatprep.subr.mxu0 0.0
    %69 = vmatpush1.msra.mxu0 %v49
    %70 = vmatprep.subr.mxu0 0.0
    %71 = vmatpush1.msra.mxu0 0.0
    %72 = vmatprep.subr.mxu0 0.0
    %73 = vmatpush1.msra.mxu0 0.0
    %74 = vmatprep.subr.mxu0 0.0
    %75 = vmatpush1.msra.mxu0 0.0
    %76 = vmatprep.subr.mxu0 0.0
    %77 = vmatpush1.msra.mxu0 0.0
    %78 = vmatprep.subr.mxu0 0.0
    %79 = vmatpush1.msra.mxu0 0.0
    %80 = vmatprep.subr.mxu0 0.0
    %81 = vmatpush1.msra.mxu0 0.0
    %82 = vmatprep.subr.mxu0 0.0
    %83 = vmatpush1.msra.mxu0 0.0
    %84 = vmatprep.subr.mxu0 0.0
    %85 = vmatpush1.msra.mxu0 0.0
    %86 = vmatprep.subr.mxu0 0.0
    %87 = vmatpush1.msra.mxu0 0.0
    %88 = vmatprep.subr.mxu0 0.0
    %89 = vmatpush1.msra.mxu0 0.0
    %90 = vmatprep.subr.mxu0 0.0
    %91 = vmatpush1.msra.mxu0 0.0
    %92 = vmatprep.subr.mxu0 0.0
    %93 = vmatpush1.msra.mxu0 0.0
    %94 = vmatprep.subr.mxu0 0.0
    %95 = vmatpush1.msra.mxu0 0.0
    %96 = vmatprep.subr.mxu0 0.0
    %97 = vmatpush1.msra.mxu0 0.0
    %98 = vmatprep.subr.mxu0 0.0
    %99 = vmatpush1.msra.mxu0 0.0
    %100 = vmatprep.subr.mxu0 0.0
    %101 = vmatpush1.msra.mxu0 0.0
    %102 = vmatprep.subr.mxu0 0.0
    %103 = vmatpush1.msra.mxu0 0.0
    %104 = vmatprep.subr.mxu0 0.0
    %105 = vmatpush1.msra.mxu0 0.0
    %106 = vmatprep.subr.mxu0 0.0
    %107 = vmatpush1.msra.mxu0 0.0
    %108 = vmatprep.subr.mxu0 0.0
    %109 = vmatpush1.msra.mxu0 0.0
    %110 = vmatprep.subr.mxu0 0.0
    %111 = vmatpush1.msra.mxu0 0.0
    %112 = vmatprep.subr.mxu0 0.0
    %113 = vmatpush1.msra.mxu0 0.0
    %114 = vmatprep.subr.mxu0 0.0
    %115 = vmatpush1.msra.mxu0 0.0
    %116 = vmatprep.subr.mxu0 0.0
    %117 = vmatpush1.msra.mxu0 0.0
    %118 = vmatprep.mubr.f32.mxu0 0.0
    %119 = vmatmul.mubr.f32.gmra.mrb[0].mxu0 %v52
    %v120 = vpop.f32.mrb[0].mxu0
    %v121 = vadd.f32 0.0, %v120
    %v122 = vpop.f32.mrb[0].mxu0
    %123 = vdwg.mxu0
    %v124 = vld [vmem:[%s2] sm:$0xff]
    %v125 = vld [vmem:[%s2 + $0x8] sm:$0xff]
    %v126 = vld [vmem:[%s2 + $0x10] sm:$0xff]
    %v127 = vld [vmem:[%s2 + $0x18] sm:$0xff]
    %v128 = vld [vmem:[%s4] sm:$0x1]
    %vm129 = vcmask 261120
    %v131 = vsel %vm129, %v121, 0
    %133 = vmatprep.subr.mxu0 0.0
    %134 = vmatpush1.msra.mxu0 %v124
    %135 = vmatprep.subr.mxu0 0.0
    %136 = vmatpush1.msra.mxu0 %v125
    %137 = vmatprep.subr.mxu0 0.0
    %138 = vmatpush1.msra.mxu0 %v126
    %139 = vmatprep.subr.mxu0 0.0
    %140 = vmatpush1.msra.mxu0 %v127
    %141 = vmatprep.subr.mxu0 0.0
    %142 = vmatpush1.msra.mxu0 0.0
    %143 = vmatprep.subr.mxu0 0.0
    %144 = vmatpush1.msra.mxu0 0.0
    %145 = vmatprep.subr.mxu0 0.0
    %146 = vmatpush1.msra.mxu0 0.0
    %147 = vmatprep.subr.mxu0 0.0
    %148 = vmatpush1.msra.mxu0 0.0
    %149 = vmatprep.subr.mxu0 0.0
    %150 = vmatpush1.msra.mxu0 0.0
    %151 = vmatprep.subr.mxu0 0.0
    %152 = vmatpush1.msra.mxu0 0.0
    %153 = vmatprep.subr.mxu0 0.0
    %154 = vmatpush1.msra.mxu0 0.0
    %155 = vmatprep.subr.mxu0 0.0
    %156 = vmatpush1.msra.mxu0 0.0
    %157 = vmatprep.subr.mxu0 0.0
    %158 = vmatpush1.msra.mxu0 0.0
    %159 = vmatprep.subr.mxu0 0.0
    %160 = vmatpush1.msra.mxu0 0.0
    %161 = vmatprep.subr.mxu0 0.0
    %162 = vmatpush1.msra.mxu0 0.0
    %163 = vmatprep.subr.mxu0 0.0
    %164 = vmatpush1.msra.mxu0 0.0
    %165 = vmatprep.subr.mxu0 0.0
    %166 = vmatpush1.msra.mxu0 0.0
    %167 = vmatprep.subr.mxu0 0.0
    %168 = vmatpush1.msra.mxu0 0.0
    %169 = vmatprep.subr.mxu0 0.0
    %170 = vmatpush1.msra.mxu0 0.0
    %171 = vmatprep.subr.mxu0 0.0
    %172 = vmatpush1.msra.mxu0 0.0
    %173 = vmatprep.subr.mxu0 0.0
    %174 = vmatpush1.msra.mxu0 0.0
    %175 = vmatprep.subr.mxu0 0.0
    %176 = vmatpush1.msra.mxu0 0.0
    %177 = vmatprep.subr.mxu0 0.0
    %178 = vmatpush1.msra.mxu0 0.0
    %179 = vmatprep.subr.mxu0 0.0
    %180 = vmatpush1.msra.mxu0 0.0
    %181 = vmatprep.subr.mxu0 0.0
    %182 = vmatpush1.msra.mxu0 0.0
    %183 = vmatprep.subr.mxu0 0.0
    %184 = vmatpush1.msra.mxu0 0.0
    %185 = vmatprep.subr.mxu0 0.0
    %186 = vmatpush1.msra.mxu0 0.0
    %187 = vmatprep.subr.mxu0 0.0
    %188 = vmatpush1.msra.mxu0 0.0
    %189 = vmatprep.subr.mxu0 0.0
    %190 = vmatpush1.msra.mxu0 0.0
    %191 = vmatprep.subr.mxu0 0.0
    %192 = vmatpush1.msra.mxu0 0.0
    %193 = vmatprep.subr.mxu0 0.0
    %194 = vmatpush1.msra.mxu0 0.0
    %195 = vmatprep.subr.mxu0 0.0
    %196 = vmatpush1.msra.mxu0 0.0
    %197 = vmatprep.mubr.f32.mxu0 0.0
    %198 = vmatmul.mubr.f32.gmra.mrb[0].mxu0 %v131
    %v199 = vpop.f32.mrb[0].mxu0
    %v200 = vadd.f32 %v128, %v199
    %v201 = vpop.f32.mrb[0].mxu0
    %202 = vdwg.mxu0
    %v203 = vld [vmem:[%s3] sm:$0xff]
    %v204 = vld [vmem:[%s3 + $0x8] sm:$0xff]
    %v205 = vld [vmem:[%s3 + $0x10] sm:$0xff]
    %v206 = vld [vmem:[%s3 + $0x18] sm:$0xff]
    %v207 = vld [vmem:[%s5] sm:$0x1]
    %v208 = vld [vmem:[%s6] sm:$0x1]
    %v210 = vsel %vm129, %v208, 0
    %212 = vmatprep.subr.mxu0 0.0
    %213 = vmatpush1.msra.mxu0 %v203
    %214 = vmatprep.subr.mxu0 0.0
    %215 = vmatpush1.msra.mxu0 %v204
    %216 = vmatprep.subr.mxu0 0.0
    %217 = vmatpush1.msra.mxu0 %v205
    %218 = vmatprep.subr.mxu0 0.0
    %219 = vmatpush1.msra.mxu0 %v206
    %220 = vmatprep.subr.mxu0 0.0
    %221 = vmatpush1.msra.mxu0 0.0
    %222 = vmatprep.subr.mxu0 0.0
    %223 = vmatpush1.msra.mxu0 0.0
    %224 = vmatprep.subr.mxu0 0.0
    %225 = vmatpush1.msra.mxu0 0.0
    %226 = vmatprep.subr.mxu0 0.0
    %227 = vmatpush1.msra.mxu0 0.0
    %228 = vmatprep.subr.mxu0 0.0
    %229 = vmatpush1.msra.mxu0 0.0
    %230 = vmatprep.subr.mxu0 0.0
    %231 = vmatpush1.msra.mxu0 0.0
    %232 = vmatprep.subr.mxu0 0.0
    %233 = vmatpush1.msra.mxu0 0.0
    %234 = vmatprep.subr.mxu0 0.0
    %235 = vmatpush1.msra.mxu0 0.0
    %236 = vmatprep.subr.mxu0 0.0
    %237 = vmatpush1.msra.mxu0 0.0
    %238 = vmatprep.subr.mxu0 0.0
    %239 = vmatpush1.msra.mxu0 0.0
    %240 = vmatprep.subr.mxu0 0.0
    %241 = vmatpush1.msra.mxu0 0.0
    %242 = vmatprep.subr.mxu0 0.0
    %243 = vmatpush1.msra.mxu0 0.0
    %244 = vmatprep.subr.mxu0 0.0
    %245 = vmatpush1.msra.mxu0 0.0
    %246 = vmatprep.subr.mxu0 0.0
    %247 = vmatpush1.msra.mxu0 0.0
    %248 = vmatprep.subr.mxu0 0.0
    %249 = vmatpush1.msra.mxu0 0.0
    %250 = vmatprep.subr.mxu0 0.0
    %251 = vmatpush1.msra.mxu0 0.0
    %252 = vmatprep.subr.mxu0 0.0
    %253 = vmatpush1.msra.mxu0 0.0
    %254 = vmatprep.subr.mxu0 0.0
    %255 = vmatpush1.msra.mxu0 0.0
    %256 = vmatprep.subr.mxu0 0.0
    %257 = vmatpush1.msra.mxu0 0.0
    %258 = vmatprep.subr.mxu0 0.0
    %259 = vmatpush1.msra.mxu0 0.0
    %260 = vmatprep.subr.mxu0 0.0
    %261 = vmatpush1.msra.mxu0 0.0
    %262 = vmatprep.subr.mxu0 0.0
    %263 = vmatpush1.msra.mxu0 0.0
    %264 = vmatprep.subr.mxu0 0.0
    %265 = vmatpush1.msra.mxu0 0.0
    %266 = vmatprep.subr.mxu0 0.0
    %267 = vmatpush1.msra.mxu0 0.0
    %268 = vmatprep.subr.mxu0 0.0
    %269 = vmatpush1.msra.mxu0 0.0
    %270 = vmatprep.subr.mxu0 0.0
    %271 = vmatpush1.msra.mxu0 0.0
    %272 = vmatprep.subr.mxu0 0.0
    %273 = vmatpush1.msra.mxu0 0.0
    %274 = vmatprep.subr.mxu0 0.0
    %275 = vmatpush1.msra.mxu0 0.0
    %276 = vmatprep.mubr.f32.mxu0 0.0
    %277 = vmatmul.mubr.f32.gmra.mrb[0].mxu0 %v210
    %v278 = vpop.f32.mrb[0].mxu0
    %v279 = vadd.f32 %v207, %v278
    %v280 = vpop.f32.mrb[0].mxu0
    %281 = vdwg.mxu0
    %v282 = vadd.f32 %v200, %v279
    %v283 = vxor.u32 %v282, 2147483648
    %v284 = vmul.f32 %v283, 1.442695
    %v285 = vpow.pop %v284
    %v286 = vadd.f32 %v285, 1.0
    %v287 = vrcp.pop %v286
    %v288 = vmul.f32 1.0, %v287
    %290 = vrot.lane.b32.xlu0 %v279, 64
    %v291 = vpop.permute.xlu0 %290
    %v293 = vmul.f32 %v288, %v291
    %295 = vrot.lane.b32.xlu0 %v293, 64
    %v296 = vpop.permute.xlu0 %295
    %v298 = vadd.f32 %v200, %v296
    %v299 = vtanh.pop %v298
    %v300 = vsub.f32 1.0, %v288
    %302 = vrot.lane.b32.xlu0 %v299, 96
    %v303 = vpop.permute.xlu0 %302
    %v305 = vmul.f32 %v300, %v303
    %v306 = vlaneseq
    %v307 = vshrl.u32 %v306, 7
    %v308 = vsub.s32 0, %v307
    %v309 = vrot.slane %v208, %v308
    %310 = vrot.lane.b32.xlu0 %v309, 32
    %v311 = vpop.permute.xlu0 %310
    %v313 = vmul.f32 %v288, %v311
    %v314 = vadd.f32 %v305, %v313
    %316 = vrot.lane.b32.xlu0 %v314, 96
    %v317 = vpop.permute.xlu0 %316
    %vm319 = vcmask 253952
    %320 = vst.msk [vmem:[#allocation3] sm:$0x1] %vm319, %v317
    // Predicated region
    $region30: #{tpu_custom_call.1} parent=1 // pred_check
      _
    $region31: #{tpu_custom_call.1} parent=1 // pred_check_branch
      %322 = sbr.rel (0) target = $region33
    $region32: #{tpu_custom_call.1} parent=1 // pred_region
      %s324 = ssub.s32 16, 16
      %325 = vsyncadd [#allocation4], %s324
      %s327 = sshll.u32 [#allocation3], 4
      %s328 = int_to_ptr.vmem [resolvable:$true] %s327
      %330 = dma.vmem_to_hbm [thread:$0]  %s328, 16, %s7, [#allocation4]
    $region33: #{tpu_custom_call.1} parent=1 // pred_fallthru
      _
    // Predicated region
    $region34: #{tpu_custom_call.1} parent=1 // pred_check
      _
    $region35: #{tpu_custom_call.1} parent=1 // pred_check_branch
      %332 = sbr.rel (0) target = $region37
    $region36: #{tpu_custom_call.1} parent=1 // pred_region
      %333 = dma.done [#allocation4], 16
    $region37: #{tpu_custom_call.1} parent=1 // pred_fallthru
      _
    %334 = vsyncpa [#allocation4], 1

</llo_original>
